<compile_context>
chip_gen: v6e
topology: v6e:2x2x1
jax: 0.10.0
libtpu: 0.0.40
codegen_flags: <defaults>
</compile_context>

<pallas_src>
import math

import jax
import jax.numpy as jnp
from jax.experimental import pallas as pl
from jax.experimental.pallas import tpu as pltpu


# Arrays below this size are not worth splitting into multiple grid steps.
_MIN_SPLIT_BYTES = 2 * 1024 * 1024


def _budgets():
    """(per-buffer tile bytes, scoped VMEM limit), sized per TPU generation.

    v5e/v6e (128 MiB VMEM): 8 MiB tiles, 96 MiB limit ->
        2 x (in + out) x 8 MiB = 32 MiB of double buffers, ample headroom.
    v7x (64 MiB VMEM) / unknown: 4 MiB tiles, 48 MiB limit ->
        16 MiB of double buffers, safely under the smaller physical VMEM.
    """
    vmem = 64 * 1024 * 1024  # conservative default (v7x per-TensorCore)
    try:
        vmem = int(pltpu.get_tpu_info().vmem_capacity_bytes)
    except Exception:
        pass
    if vmem >= 128 * 1024 * 1024:
        return 8 * 1024 * 1024, 96 * 1024 * 1024
    return 4 * 1024 * 1024, 48 * 1024 * 1024


def _sublane_multiple(dtype):
    # f32 -> 8, bf16 -> 16, int8/fp8 -> 32 (sub-32-bit dtypes pack along sublanes).
    return max(32 // jnp.dtype(dtype).itemsize, 8)


def _round_up(x, m):
    return ((x + m - 1) // m) * m


def _tile_dim(dim, bytes_per_unit, multiple, tile_bytes):
    """Largest tile along `dim` whose buffer stays within `tile_bytes`.

    Returns the full `dim` if it fits (full-extent blocks are always legal);
    otherwise the largest multiple of `multiple` that fits (at least
    `multiple`).  Partial trailing blocks are handled by Pallas.
    """
    max_units = max(tile_bytes // max(bytes_per_unit, 1), 1)
    if dim <= max_units:
        return dim
    tile = (max_units // multiple) * multiple
    return max(tile, multiple)


# ------------------------- kernels -------------------------

def _add_bias_2d_kernel(x_ref, b_ref, o_ref):
    # x_ref: (TB, TF), b_ref: (1, TF) resident across row-tile grid steps.
    o_ref[...] = x_ref[...] + b_ref[...]


def _add_bias_4d_kernel(x_ref, b_ref, o_ref):
    # x_ref: (TC, THW)  (batch dim squeezed), b_ref: (TC, 1) resident.
    o_ref[...] = x_ref[...] + b_ref[...]


# ------------------------- wrappers -------------------------

def _add_bias_2d(x, bias_param):
    B, F = x.shape
    dtype = x.dtype
    itemsize = jnp.dtype(dtype).itemsize
    sub = _sublane_multiple(dtype)
    bias_row = bias_param.reshape(1, F).astype(dtype)          # bias.t().view(1,-1)

    # Lane-density fold (gcd-based): view (B, F) as (B//k, k*F) whenever
    # k = 128 // gcd(F, 128) divides B, so the lane axis becomes a 128-multiple
    # and every store is an unmasked full-width vst.  Bias is tiled to match;
    # folded column f' still maps to bias[f' % F], preserving numerics.
    k = 128 // math.gcd(F, 128)
    fold = k if (k > 1 and B % k == 0) else 1
    Bf, Ff = B // fold, F * fold
    x_in = x.reshape(Bf, Ff) if fold > 1 else x
    b_in = jnp.tile(bias_row, (1, fold)) if fold > 1 else bias_row

    tile_bytes, vmem_limit = _budgets()

    # Feature tile first (128-lane multiples), then the row tile given it.
    # Both respect the per-buffer budget by construction (no more floor blowup
    # for huge F).
    tf = _tile_dim(Ff, sub * itemsize, 128, tile_bytes)
    tb = _tile_dim(Bf, tf * itemsize, sub, tile_bytes)

    # Guarantee >= 2 grid steps for non-tiny arrays (v7x: 2 TensorCores; also
    # enables DMA/compute/DMA overlap on a single core).
    total_bytes = Bf * Ff * itemsize
    if total_bytes >= _MIN_SPLIT_BYTES and pl.cdiv(Bf, tb) * pl.cdiv(Ff, tf) < 2:
        if Bf > sub:
            tb = min(tb, _round_up(pl.cdiv(Bf, 2), sub))
        elif Ff > 128:
            tf = min(tf, _round_up(pl.cdiv(Ff, 2), 128))

    grid = (pl.cdiv(Bf, tb), pl.cdiv(Ff, tf))
    cost = pl.CostEstimate(
        flops=Bf * Ff,
        transcendentals=0,
        bytes_accessed=2 * Bf * Ff * itemsize + Ff * itemsize,
    )

    # TODO(synk): expose input_output_aliases={1: 0} when the caller can donate
    # x to make the add logically in-place (halves HBM footprint, not traffic).
    out = pl.pallas_call(
        _add_bias_2d_kernel,
        out_shape=jax.ShapeDtypeStruct((Bf, Ff), dtype),
        grid_spec=pl.GridSpec(
            grid=grid,
            in_specs=[
                pl.BlockSpec((tb, tf), lambda i, j: (i, j)),
                pl.BlockSpec((1, tf), lambda i, j: (0, j)),    # bias tracks F tile
            ],
            out_specs=pl.BlockSpec((tb, tf), lambda i, j: (i, j)),
        ),
        compiler_params=pltpu.CompilerParams(
            dimension_semantics=("parallel", "parallel"),
            vmem_limit_bytes=vmem_limit,
        ),
        cost_estimate=cost,
    )(x_in, b_in)
    return out.reshape(B, F) if fold > 1 else out


def _add_bias_4d(x, bias_param):
    B, C, H, W = x.shape
    HW = H * W
    dtype = x.dtype
    itemsize = jnp.dtype(dtype).itemsize
    sub = _sublane_multiple(dtype)

    x_flat = x.reshape(B, C, HW)                               # glue reshape
    bias_col = bias_param.reshape(C, 1).astype(dtype)          # (C, 1)

    # Sublane-density fold (gcd-based): fold g = sub // gcd(C, sub) batch
    # elements into the channel axis when it divides cleanly, so vregs and
    # stores are sublane-dense.  Folded channel c' maps to bias[c' % C].
    g = sub // math.gcd(C, sub)
    fold = g if (g > 1 and B % g == 0) else 1
    Bf, Cf = B // fold, C * fold
    if fold > 1:
        x_flat = x_flat.reshape(Bf, Cf, HW)
        bias_col = jnp.tile(bias_col, (fold, 1))               # (Cf, 1)

    tile_bytes, vmem_limit = _budgets()

    # Channel tile first (sublane multiples) so huge C can't blow the budget,
    # then the spatial (lane) tile given it.  Budget holds by construction.
    tc = _tile_dim(Cf, 128 * itemsize, sub, tile_bytes)
    thw = _tile_dim(HW, tc * itemsize, 128, tile_bytes)

    # Guarantee >= 2 grid steps for non-tiny arrays (prefer splitting the lane
    # axis: keeps 128-aligned stores and the full bias slab per block).
    total_bytes = Bf * Cf * HW * itemsize
    if (total_bytes >= _MIN_SPLIT_BYTES
            and Bf * pl.cdiv(Cf, tc) * pl.cdiv(HW, thw) < 2):
        if HW > 128:
            thw = min(thw, _round_up(pl.cdiv(HW, 2), 128))
        elif Cf > sub:
            tc = min(tc, _round_up(pl.cdiv(Cf, 2), sub))

    grid = (Bf, pl.cdiv(Cf, tc), pl.cdiv(HW, thw))
    cost = pl.CostEstimate(
        flops=Bf * Cf * HW,
        transcendentals=0,
        bytes_accessed=2 * Bf * Cf * HW * itemsize + Cf * itemsize,
    )

    out_flat = pl.pallas_call(
        _add_bias_4d_kernel,
        out_shape=jax.ShapeDtypeStruct((Bf, Cf, HW), dtype),
        grid_spec=pl.GridSpec(
            grid=grid,
            in_specs=[
                pl.BlockSpec((pl.Squeezed(), tc, thw),
                             lambda b, cj, hj: (b, cj, hj)),
                pl.BlockSpec((tc, 1), lambda b, cj, hj: (cj, 0)),  # bias tracks C tile
            ],
            out_specs=pl.BlockSpec((pl.Squeezed(), tc, thw),
                                   lambda b, cj, hj: (b, cj, hj)),
        ),
        compiler_params=pltpu.CompilerParams(
            dimension_semantics=("parallel", "parallel", "parallel"),
            vmem_limit_bytes=vmem_limit,
        ),
        cost_estimate=cost,
    )(x_flat, bias_col)
    return out_flat.reshape(B, C, H, W)


def add_bias(x, bias_param):
    """Pallas equivalent of AddBias.forward.

    bias_param has shape (F, 1), matching nn.Parameter(bias.unsqueeze(1)).
    """
    if x.ndim == 2:
        return _add_bias_2d(x, bias_param)
    elif x.ndim == 4:
        return _add_bias_4d(x, bias_param)
    else:
        raise ValueError(f"AddBias expects 2D or 4D input, got ndim={x.ndim}")


# ------------------------- demo -------------------------

if __name__ == "__main__":
    key = jax.random.PRNGKey(0)
    k1, k2, k3 = jax.random.split(key, 3)

    # Parameter: bias of F features, stored as (F, 1) like nn.Parameter(bias.unsqueeze(1)).
    F = 4
    bias_param = (jnp.arange(F, dtype=jnp.float32) * 0.1 - 0.15).reshape(F, 1)

    # 2D case: x of shape (B, F)
    x2d = jax.random.normal(k1, (2, F), dtype=jnp.float32)
    y2d = add_bias(x2d, bias_param)
    jax.block_until_ready(y2d)
    ref2d = x2d + bias_param.reshape(1, F)
    assert y2d.shape == ref2d.shape and jnp.allclose(y2d, ref2d, atol=1e-6), "2D mismatch"

    # 4D case: x of shape (B, C, H, W) with C == F
    x4d = jax.random.normal(k2, (2, F, 16, 16), dtype=jnp.float32)
    y4d = add_bias(x4d, bias_param)
    jax.block_until_ready(y4d)
    ref4d = x4d + bias_param.reshape(1, F, 1, 1)
    assert y4d.shape == ref4d.shape and jnp.allclose(y4d, ref4d, atol=1e-6), "4D mismatch"

    # Medium 2D case exercising the generalized gcd lane fold (F=96 -> fold 4).
    F2 = 96
    bias96 = (jnp.arange(F2, dtype=jnp.float32) * 0.01 - 0.3).reshape(F2, 1)
    x2d_m = jax.random.normal(k3, (256, F2), dtype=jnp.float32)
    y2d_m = add_bias(x2d_m, bias96)
    jax.block_until_ready(y2d_m)
    ref2d_m = x2d_m + bias96.reshape(1, F2)
    assert y2d_m.shape == ref2d_m.shape and jnp.allclose(y2d_m, ref2d_m, atol=1e-6), \
        "2D folded mismatch"

    print("KERNEL_OK")
</pallas_src>

<mosaic_0001>
module attributes {stable_mosaic.version = 11 : i64} {
  func.func @_add_bias_2d_kernel(%arg0: i32, %arg1: i32, %arg2: memref<2x4xf32, #tpu.memory_space<vmem>>, %arg3: memref<1x4xf32, #tpu.memory_space<vmem>>, %arg4: memref<2x4xf32, #tpu.memory_space<vmem>>) attributes {dimension_semantics = [#tpu.dimension_semantics<parallel>, #tpu.dimension_semantics<parallel>], iteration_bounds = array<i64: 1, 1>, scalar_prefetch = 0 : i64, scratch_operands = 0 : i64, tpu.core_type = #tpu.core_type<tc>, window_params = [{transform_indices = @transform_0, window_bounds = array<i64: 2, 4>}, {transform_indices = @transform_1, window_bounds = array<i64: 1, 4>}, {transform_indices = @transform_2, window_bounds = array<i64: 2, 4>}]} {
    %c0 = arith.constant 0 : index
    %c0_0 = arith.constant 0 : index
    %0 = vector.load %arg2[%c0, %c0_0] : memref<2x4xf32, #tpu.memory_space<vmem>>, vector<2x4xf32>
    %c0_1 = arith.constant 0 : index
    %c0_2 = arith.constant 0 : index
    %1 = vector.load %arg3[%c0_1, %c0_2] : memref<1x4xf32, #tpu.memory_space<vmem>>, vector<1x4xf32>
    %2 = vector.broadcast %1 : vector<1x4xf32> to vector<2x4xf32>
    %3 = arith.addf %0, %2 : vector<2x4xf32>
    %c0_3 = arith.constant 0 : index
    %c0_4 = arith.constant 0 : index
    %4 = vector.load %arg4[%c0_3, %c0_4] : memref<2x4xf32, #tpu.memory_space<vmem>>, vector<2x4xf32>
    tpu.vector_store %arg4[%c0_3, %c0_4], %3 {strides = array<i32>} : memref<2x4xf32, #tpu.memory_space<vmem>>, vector<2x4xf32>,
    return
  }
  func.func @transform_0(%arg0: i32, %arg1: i32) -> (i32, i32) {
    %c0_i32 = arith.constant 0 : i32
    return %arg0, %arg1 : i32, i32
  }
  func.func @transform_1(%arg0: i32, %arg1: i32) -> (i32, i32) {
    %c0_i32 = arith.constant 0 : i32
    %c0_i32_0 = arith.constant 0 : i32
    return %c0_i32, %arg1 : i32, i32
  }
  func.func @transform_2(%arg0: i32, %arg1: i32) -> (i32, i32) {
    %c0_i32 = arith.constant 0 : i32
    return %arg0, %arg1 : i32, i32
  }
}

</mosaic_0001>

<llo_original>
// kernel: tpu_custom_call.1
$region0: #{tpu_custom_call.1}
  #allocation0 [shape = 'u32[]', space=smem, size = 0x4, offset = 0x4, fixed_abs, tag = 'smem constant byte address 0x4 - core index']
  #allocation1 [shape = 'u32[144,128]{1,0:T(1,128)}', space=vmem, size = 0x12000, scoped, tag = 'internal scratch']
  %s0 = inlined_call_operand.hbm [shape: f32[2,4], index: 0, kind: input, shape index: {}]
  %s1 = inlined_call_operand.vmem [shape: f32[1,4], index: 1, kind: input, shape index: {}]
  %s2 = inlined_call_operand.hbm [shape: f32[2,4], index: 2, kind: output, shape index: {}]
  %s3 = sld [smem:[#allocation0]]
  $region22: #{tpu_custom_call.1} parent=0
    _
  %s5 = ssub.s32 1, %s3
  %s6 = scalar_select 0, %s5, %s3
  $region1: #{tpu_custom_call.1} parent=0
    #allocation2 [shape = 'u8[1024]{0}', space=vmem, size = 0x400, scoped, tag = 'input window, operand 0, single buffered']
    #allocation3 [shape = 's32[1]{0}', space=sflag, size = 0x4, scoped, tag = 'scoped memory for tpu_custom_call.1']
    #allocation4 [shape = 's32[1]{0}', space=sflag, size = 0x4, scoped, tag = 'scoped memory for tpu_custom_call.1']
    #allocation5 [shape = 'u8[1024]{0}', space=vmem, size = 0x400, scoped, tag = 'output window, operand 0, single buffered']
    %7 = vsyncpa [#allocation3], 0
    %8 = vsyncpa [#allocation4], 0
    // Predicated region
    $region2: #{tpu_custom_call.1} parent=1 // pred_check
      _
    $region3: #{tpu_custom_call.1} parent=1 // pred_check_branch
      %10 = sbr.rel (0) target = $region5
    $region4: #{tpu_custom_call.1} parent=1 // pred_region
      %s12 = ssub.s32 32, 32
      %13 = vsyncadd [#allocation3], %s12
      %s15 = sshll.u32 [#allocation2], 4
      %s16 = int_to_ptr.vmem [resolvable:$true] %s15
      %18 = dma.hbm_to_vmem [thread:$0]  %s0, 32, %s16, [#allocation3]
    $region5: #{tpu_custom_call.1} parent=1 // pred_fallthru
      _
    // Predicated region
    $region6: #{tpu_custom_call.1} parent=1 // pred_check
      _
    $region7: #{tpu_custom_call.1} parent=1 // pred_check_branch
      %20 = sbr.rel (0) target = $region9
    $region8: #{tpu_custom_call.1} parent=1 // pred_region
      _
    $region9: #{tpu_custom_call.1} parent=1 // pred_fallthru
      _
    // Predicated region
    $region10: #{tpu_custom_call.1} parent=1 // pred_check
      _
    $region11: #{tpu_custom_call.1} parent=1 // pred_check_branch
      %22 = sbr.rel (0) target = $region13
    $region12: #{tpu_custom_call.1} parent=1 // pred_region
      %23 = dma.done [#allocation3], 32
    $region13: #{tpu_custom_call.1} parent=1 // pred_fallthru
      _
    %v24 = vld [vmem:[#allocation2] sm:$0x3]
    %v25 = vld [vmem:[%s1] sm:$0x1]
    %v27 = vlaneseq
    %v28 = vshrl.u32 %v27, 7
    %v29 = vsub.s32 0, %v28
    %v30 = vrot.slane %v25, %v29
    %v32 = vadd.f32 %v24, %v30
    %vm33 = vcmask 25600
    %34 = vst.msk [vmem:[#allocation5] sm:$0x3] %vm33, %v32
    // Predicated region
    $region14: #{tpu_custom_call.1} parent=1 // pred_check
      _
    $region15: #{tpu_custom_call.1} parent=1 // pred_check_branch
      %36 = sbr.rel (0) target = $region17
    $region16: #{tpu_custom_call.1} parent=1 // pred_region
      %s38 = ssub.s32 32, 32
      %39 = vsyncadd [#allocation4], %s38
      %s41 = sshll.u32 [#allocation5], 4
      %s42 = int_to_ptr.vmem [resolvable:$true] %s41
      %44 = dma.vmem_to_hbm [thread:$0]  %s42, 32, %s2, [#allocation4]
    $region17: #{tpu_custom_call.1} parent=1 // pred_fallthru
      _
    // Predicated region
    $region18: #{tpu_custom_call.1} parent=1 // pred_check
      _
    $region19: #{tpu_custom_call.1} parent=1 // pred_check_branch
      %46 = sbr.rel (0) target = $region21
    $region20: #{tpu_custom_call.1} parent=1 // pred_region
      %47 = dma.done [#allocation4], 32
    $region21: #{tpu_custom_call.1} parent=1 // pred_fallthru
      _
    %48 = vsyncpa [#allocation3], 1
    %49 = vsyncpa [#allocation4], 1

</llo_original>
